<compile_context>
chip_gen: v7x
topology: tpu7x:2x2x1
jax: 0.10.0
libtpu: 0.0.40
codegen_flags: <defaults>
</compile_context>

<pallas_src>
import jax
import jax.numpy as jnp
from jax.experimental import pallas as pl
from jax.experimental.pallas import tpu as pltpu


def _round_up(n, m):
    return ((n + m - 1) // m) * m


def _log_prob_kernel(x_ref, w_ref, b_ref, c_ref, out_ref, acc_ref):
    # x_ref: [tb, Dp] (native dtype), w_ref: [Dp, tn] (native dtype),
    # b_ref: [1, tn] f32, c_ref: [1] SMEM f32 (log|det W| - D/2*log(2*pi)),
    # out_ref: [1, tb] f32 (batch on lanes), acc_ref: [tb, 128] f32 scratch.
    j = pl.program_id(1)

    @pl.when(j == 0)
    def _init():
        acc_ref[...] = jnp.zeros_like(acc_ref)

    # MXU matmul in native operand dtype (bf16 -> native MXU rate), f32 accum.
    z = jnp.dot(x_ref[...], w_ref[...], preferred_element_type=jnp.float32)
    z = z + b_ref[...]          # f32 bias add
    zz = z * z                  # f32 squaring (VPU)

    # Lane-dense partial sum of squares: fold the tn lanes of this feature
    # tile down to 128 lanes with pure VPU adds (no cross-lane traffic in the
    # inner loop).
    tn = zz.shape[-1]
    partial = zz[:, 0:128]
    for c in range(128, tn, 128):
        partial = partial + zz[:, c:c + 128]
    acc_ref[...] = acc_ref[...] + partial

    @pl.when(j == pl.num_programs(1) - 1)
    def _finalize():
        # One XLU transpose + sublane reduce per batch tile; apply the -0.5
        # scale and the folded constant exactly once per output element.
        acc_t = jnp.transpose(acc_ref[...])              # (128, tb)
        ssq = jnp.sum(acc_t, axis=0, keepdims=True)      # (1, tb)
        out_ref[...] = c_ref[0] - 0.5 * ssq


def flow_log_prob(inputs, weight, bias, context=None, logabsdet=None):
    """Equivalent of LogProbWrapper(flow).forward(inputs, context)."""
    # TODO(synk): `context` is unused — the synthetic flow is unconditional.
    B, D = inputs.shape

    # Parameter-only glue: Jacobian log-determinant of the linear flow.
    # Pass `logabsdet=` to avoid recomputing the O(D^3) slogdet per call when
    # W is a fixed parameter.
    if logabsdet is None:
        _, logabsdet = jnp.linalg.slogdet(weight.astype(jnp.float32))
    const = logabsdet.astype(jnp.float32) - 0.5 * D * jnp.log(2.0 * jnp.pi)
    const = jnp.reshape(const, (1,)).astype(jnp.float32)

    # Tile sizes: lane/MXU friendly, modest enough for v7x's smaller VMEM.
    tb = 256 if B > 256 else 128                 # always a multiple of 128
    tn = min(512, _round_up(D, 128))             # multiple of 128, <= 512
    B_pad = _round_up(B, tb)
    D_pad = _round_up(D, tn)
    nbt = B_pad // tb
    nnt = D_pad // tn

    # Zero-padding is exact: padded feature columns of W/b are zero (no
    # contribution to ||z||^2); padded batch rows are sliced off below.
    x_p = jnp.pad(inputs, ((0, B_pad - B), (0, D_pad - D)))
    w_p = jnp.pad(weight, ((0, D_pad - D), (0, D_pad - D)))
    b_p = jnp.pad(bias.astype(jnp.float32), (0, D_pad - D)).reshape(1, D_pad)

    bytes_accessed = (x_p.size * x_p.dtype.itemsize
                      + nbt * w_p.size * w_p.dtype.itemsize
                      + B_pad * 4)

    out = pl.pallas_call(
        _log_prob_kernel,
        out_shape=jax.ShapeDtypeStruct((1, B_pad), jnp.float32),
        grid=(nbt, nnt),
        in_specs=[
            pl.BlockSpec((tb, D_pad), lambda i, j: (i, 0)),   # x: resident over j
            pl.BlockSpec((D_pad, tn), lambda i, j: (0, j)),   # W column tiles
            pl.BlockSpec((1, tn), lambda i, j: (0, j)),       # bias tile (f32)
            pl.BlockSpec(memory_space=pltpu.MemorySpace.SMEM),  # folded constant
        ],
        out_specs=pl.BlockSpec((1, tb), lambda i, j: (0, i)),  # lane-dense output
        scratch_shapes=[pltpu.VMEM((tb, 128), jnp.float32)],   # per-lane acc
        compiler_params=pltpu.CompilerParams(
            dimension_semantics=("parallel", "arbitrary"),
            vmem_limit_bytes=32 * 1024 * 1024,
        ),
        cost_estimate=pl.CostEstimate(
            flops=2 * B_pad * D_pad * D_pad,
            transcendentals=0,
            bytes_accessed=bytes_accessed,
        ),
    )(x_p, w_p, b_p, const)
    return out[0, :B]


def _reference_log_prob(inputs, weight, bias):
    x = inputs.astype(jnp.float32)
    w = weight.astype(jnp.float32)
    z = x @ w + bias.astype(jnp.float32)[None, :]
    d = z.shape[-1]
    _, logabsdet = jnp.linalg.slogdet(w)
    return (-0.5 * jnp.sum(z * z, axis=-1)
            - 0.5 * d * jnp.log(2.0 * jnp.pi) + logabsdet)


if __name__ == "__main__":
    key = jax.random.PRNGKey(0)
    kx, kw, kb = jax.random.split(key, 3)

    # Primary small test (batch=8, hidden=32), bf16 operands -> native MXU path.
    B, D = 8, 32
    x = jax.random.normal(kx, (B, D), dtype=jnp.float32).astype(jnp.bfloat16)
    W = (jnp.eye(D, dtype=jnp.float32)
         + 0.05 * jax.random.normal(kw, (D, D), dtype=jnp.float32)
         ).astype(jnp.bfloat16)
    b = 0.1 * jax.random.normal(kb, (D,), dtype=jnp.float32)

    logp = flow_log_prob(x, W, b, context=None)
    jax.block_until_ready(logp)
    assert logp.shape == (B,), logp.shape
    ref = _reference_log_prob(x, W, b)
    assert jnp.allclose(logp, ref, rtol=1e-3, atol=1e-3), (logp, ref)

    # Secondary test exercising the multi-tile grid (batch + feature tiling,
    # ragged padding, reduction-axis accumulation): grid = (2, 2).
    B2, D2 = 300, 600
    k2x, k2w, k2b = jax.random.split(jax.random.PRNGKey(1), 3)
    x2 = jax.random.normal(k2x, (B2, D2), dtype=jnp.float32).astype(jnp.bfloat16)
    W2 = (jnp.eye(D2, dtype=jnp.float32)
          + 0.02 * jax.random.normal(k2w, (D2, D2), dtype=jnp.float32)
          ).astype(jnp.bfloat16)
    b2 = 0.1 * jax.random.normal(k2b, (D2,), dtype=jnp.float32)

    logp2 = flow_log_prob(x2, W2, b2)
    jax.block_until_ready(logp2)
    assert logp2.shape == (B2,), logp2.shape
    ref2 = _reference_log_prob(x2, W2, b2)
    assert jnp.allclose(logp2, ref2, rtol=1e-3, atol=1e-2), (
        float(jnp.max(jnp.abs(logp2 - ref2))))

    print("KERNEL_OK")
</pallas_src>

<mosaic_0001>
module attributes {stable_mosaic.version = 11 : i64} {
  func.func @_log_prob_kernel(%arg0: i32, %arg1: i32, %arg2: memref<128x128xbf16, #tpu.memory_space<vmem>>, %arg3: memref<128x128xbf16, #tpu.memory_space<vmem>>, %arg4: memref<1x128xf32, #tpu.memory_space<vmem>>, %arg5: memref<1xf32, #tpu.memory_space<smem>>, %arg6: memref<1x128xf32, #tpu.memory_space<vmem>>, %arg7: memref<128x128xf32, #tpu.memory_space<vmem>>) attributes {dimension_semantics = [#tpu.dimension_semantics<parallel>, #tpu.dimension_semantics<arbitrary>], iteration_bounds = array<i64: 1, 1>, scalar_prefetch = 0 : i64, scratch_operands = 1 : i64, tpu.core_type = #tpu.core_type<tc>, window_params = [{transform_indices = @transform_0, window_bounds = array<i64: 128, 128>}, {transform_indices = @transform_1, window_bounds = array<i64: 128, 128>}, {transform_indices = @transform_2, window_bounds = array<i64: 1, 128>}, {transform_indices = @transform_3, window_bounds = array<i64: 1>}, {transform_indices = @transform_4, window_bounds = array<i64: 1, 128>}]} {
    %c0_i32 = arith.constant 0 : i32
    %0 = arith.cmpi eq, %arg1, %c0_i32 : i32
    %1 = arith.extui %0 : i1 to i32
    %c0_i32_0 = arith.constant 0 : i32
    %2 = arith.cmpi ne, %1, %c0_i32_0 : i32
    scf.if %2 {
      %cst_12 = arith.constant 0.000000e+00 : f32
      %16 = vector.broadcast %cst_12 : f32 to vector<128x128xf32>
      %c0_13 = arith.constant 0 : index
      %c0_14 = arith.constant 0 : index
      %17 = vector.load %arg7[%c0_13, %c0_14] : memref<128x128xf32, #tpu.memory_space<vmem>>, vector<128x128xf32>
      tpu.vector_store %arg7[%c0_13, %c0_14], %16 {strides = array<i32>} : memref<128x128xf32, #tpu.memory_space<vmem>>, vector<128x128xf32>,
    } else {
    }
    %c0 = arith.constant 0 : index
    %c0_1 = arith.constant 0 : index
    %3 = vector.load %arg2[%c0, %c0_1] : memref<128x128xbf16, #tpu.memory_space<vmem>>, vector<128x128xbf16>
    %c0_2 = arith.constant 0 : index
    %c0_3 = arith.constant 0 : index
    %4 = vector.load %arg3[%c0_2, %c0_3] : memref<128x128xbf16, #tpu.memory_space<vmem>>, vector<128x128xbf16>
    %cst = arith.constant dense<0.000000e+00> : vector<128x128xf32>
    %5 = tpu.matmul %3, %4, %cst {dimension_numbers = #tpu.dot_dimension_numbers<[1], [0], [0], [1], [0, 0, 1, 1], [], []>} : vector<128x128xbf16>, vector<128x128xbf16>, vector<128x128xf32> -> vector<128x128xf32>
    %c0_4 = arith.constant 0 : index
    %c0_5 = arith.constant 0 : index
    %6 = vector.load %arg4[%c0_4, %c0_5] : memref<1x128xf32, #tpu.memory_space<vmem>>, vector<1x128xf32>
    %7 = vector.broadcast %6 : vector<1x128xf32> to vector<128x128xf32>
    %8 = arith.addf %5, %7 : vector<128x128xf32>
    %9 = arith.mulf %8, %8 : vector<128x128xf32>
    %c0_6 = arith.constant 0 : index
    %c0_7 = arith.constant 0 : index
    %10 = vector.load %arg7[%c0_6, %c0_7] : memref<128x128xf32, #tpu.memory_space<vmem>>, vector<128x128xf32>
    %11 = arith.addf %10, %9 : vector<128x128xf32>
    %c0_8 = arith.constant 0 : index
    %c0_9 = arith.constant 0 : index
    %12 = vector.load %arg7[%c0_8, %c0_9] : memref<128x128xf32, #tpu.memory_space<vmem>>, vector<128x128xf32>
    tpu.vector_store %arg7[%c0_8, %c0_9], %11 {strides = array<i32>} : memref<128x128xf32, #tpu.memory_space<vmem>>, vector<128x128xf32>,
    %c0_i32_10 = arith.constant 0 : i32
    %13 = arith.cmpi eq, %arg1, %c0_i32_10 : i32
    %14 = arith.extui %13 : i1 to i32
    %c0_i32_11 = arith.constant 0 : i32
    %15 = arith.cmpi ne, %14, %c0_i32_11 : i32
    scf.if %15 {
      %c0_12 = arith.constant 0 : index
      %c0_13 = arith.constant 0 : index
      %16 = vector.load %arg7[%c0_12, %c0_13] : memref<128x128xf32, #tpu.memory_space<vmem>>, vector<128x128xf32>
      %17 = tpu.transpose %16, [1, 0] : vector<128x128xf32> -> vector<128x128xf32>
      %cst_14 = arith.constant dense<0.000000e+00> : vector<128xf32>
      %18 = vector.multi_reduction <add>, %17, %cst_14 [0] : vector<128x128xf32> to vector<128xf32>
      %19 = vector.shape_cast %18 : vector<128xf32> to vector<1x128xf32>
      %c0_15 = arith.constant 0 : index
      %20 = memref.load %arg5[%c0_15] : memref<1xf32, #tpu.memory_space<smem>>
      %cst_16 = arith.constant 5.000000e-01 : f32
      %21 = vector.broadcast %cst_16 : f32 to vector<1x128xf32>
      %22 = arith.mulf %21, %19 : vector<1x128xf32>
      %23 = vector.broadcast %20 : f32 to vector<1x128xf32>
      %24 = arith.subf %23, %22 : vector<1x128xf32>
      %c0_17 = arith.constant 0 : index
      %c0_18 = arith.constant 0 : index
      %25 = vector.load %arg6[%c0_17, %c0_18] : memref<1x128xf32, #tpu.memory_space<vmem>>, vector<1x128xf32>
      tpu.vector_store %arg6[%c0_17, %c0_18], %24 {strides = array<i32>} : memref<1x128xf32, #tpu.memory_space<vmem>>, vector<1x128xf32>,
    } else {
    }
    return
  }
  func.func @transform_0(%arg0: i32, %arg1: i32) -> (i32, i32) {
    %c0_i32 = arith.constant 0 : i32
    %c0_i32_0 = arith.constant 0 : i32
    return %arg0, %c0_i32 : i32, i32
  }
  func.func @transform_1(%arg0: i32, %arg1: i32) -> (i32, i32) {
    %c0_i32 = arith.constant 0 : i32
    %c0_i32_0 = arith.constant 0 : i32
    return %c0_i32, %arg1 : i32, i32
  }
  func.func @transform_2(%arg0: i32, %arg1: i32) -> (i32, i32) {
    %c0_i32 = arith.constant 0 : i32
    %c0_i32_0 = arith.constant 0 : i32
    return %c0_i32, %arg1 : i32, i32
  }
  func.func @transform_3(%arg0: i32, %arg1: i32) -> i32 {
    %c0_i32 = arith.constant 0 : i32
    %c0_i32_0 = arith.constant 0 : i32
    return %c0_i32 : i32
  }
  func.func @transform_4(%arg0: i32, %arg1: i32) -> (i32, i32) {
    %c0_i32 = arith.constant 0 : i32
    %c0_i32_0 = arith.constant 0 : i32
    return %c0_i32, %arg0 : i32, i32
  }
}

</mosaic_0001>

<llo_original>
// kernel: tpu_custom_call.1
$region0: #{tpu_custom_call.1}
  #allocation0 [shape = 'u32[]', space=smem, size = 0x4, offset = 0x4, fixed_abs, tag = 'smem constant byte address 0x4 - core index']
  #allocation1 [shape = 'u32[144,128]{1,0:T(1,128)}', space=vmem, size = 0x12000, scoped, tag = 'internal scratch']
  #allocation2 [shape = 'f32[128,128]{1,0:T(8,128)}', space=vmem, size = 0x10000, scoped, tag = 'scratch operand']
  #allocation3 [shape = 'f32[1]{0:T(128)S(6)}', space=smem, size = 0x200, scoped, tag = 'scoped memory for tpu_custom_call.1']
  %s0 = inlined_call_operand.hbm [shape: bf16[128,128], index: 0, kind: input, shape index: {}]
  %s1 = inlined_call_operand.hbm [shape: bf16[128,128], index: 1, kind: input, shape index: {}]
  %s2 = inlined_call_operand.vmem [shape: f32[1,128], index: 2, kind: input, shape index: {}]
  %s3 = inlined_call_operand.<no memory space> [shape: f32[1], index: 3, kind: input, shape index: {}]
  %s4 = inlined_call_operand.hbm [shape: f32[1,128], index: 4, kind: output, shape index: {}]
  %s5 = sld [smem:[#allocation0]]
  $region42: #{tpu_custom_call.1} parent=0
    _
  %s7 = ssub.s32 1, %s5
  %s8 = scalar_select 0, %s7, %s5
  %9 = sst [smem:[#allocation3]] %s3
  $region1: #{tpu_custom_call.1} parent=0
    #allocation4 [shape = 'u8[32768]{0}', space=vmem, size = 0x8000, scoped, tag = 'input window, operand 0, single buffered']
    #allocation5 [shape = 's32[1]{0}', space=sflag, size = 0x4, scoped, tag = 'scoped memory for tpu_custom_call.1']
    #allocation6 [shape = 's32[1]{0}', space=sflag, size = 0x4, scoped, tag = 'scoped memory for tpu_custom_call.1']
    #allocation7 [shape = 'u8[32768]{0}', space=vmem, size = 0x8000, scoped, tag = 'input window, operand 1, single buffered']
    #allocation8 [shape = 's32[1]{0}', space=sflag, size = 0x4, scoped, tag = 'scoped memory for tpu_custom_call.1']
    #allocation9 [shape = 'u8[512]{0}', space=vmem, size = 0x400, scoped, tag = 'output window, operand 0, single buffered']
    %10 = vsyncpa [#allocation5], 0
    %11 = vsyncpa [#allocation8], 0
    %12 = vsyncpa [#allocation6], 0
    // Predicated region
    $region2: #{tpu_custom_call.1} parent=1 // pred_check
      _
    $region3: #{tpu_custom_call.1} parent=1 // pred_check_branch
      %14 = sbr.rel (0) target = $region5
    $region4: #{tpu_custom_call.1} parent=1 // pred_region
      %s16 = ssub.s32 1024, 1024
      %17 = vsyncadd [#allocation5], %s16
      %s18 = sshll.u32 [#allocation4], 4
      %s19 = int_to_ptr.vmem [resolvable:$true] %s18
      %24 = dma.hbm_to_vmem [thread:$0]  %s0, 1024, %s19, [#allocation5], 64, 64, 4
    $region5: #{tpu_custom_call.1} parent=1 // pred_fallthru
      _
    // Predicated region
    $region6: #{tpu_custom_call.1} parent=1 // pred_check
      _
    $region7: #{tpu_custom_call.1} parent=1 // pred_check_branch
      %26 = sbr.rel (0) target = $region9
    $region8: #{tpu_custom_call.1} parent=1 // pred_region
      %s28 = ssub.s32 1024, 1024
      %29 = vsyncadd [#allocation8], %s28
      %s30 = sshll.u32 [#allocation7], 4
      %s31 = int_to_ptr.vmem [resolvable:$true] %s30
      %36 = dma.hbm_to_vmem [thread:$0]  %s1, 1024, %s31, [#allocation8], 64, 64, 4
    $region9: #{tpu_custom_call.1} parent=1 // pred_fallthru
      _
    // Predicated region
    $region10: #{tpu_custom_call.1} parent=1 // pred_check
      _
    $region11: #{tpu_custom_call.1} parent=1 // pred_check_branch
      %38 = sbr.rel (0) target = $region13
    $region12: #{tpu_custom_call.1} parent=1 // pred_region
      _
    $region13: #{tpu_custom_call.1} parent=1 // pred_fallthru
      _
    // Predicated region
    $region14: #{tpu_custom_call.1} parent=1 // pred_check
      _
    $region15: #{tpu_custom_call.1} parent=1 // pred_check_branch
      %40 = sbr.rel (0) target = $region17
    $region16: #{tpu_custom_call.1} parent=1 // pred_region
      _
    $region17: #{tpu_custom_call.1} parent=1 // pred_fallthru
      _
    // Predicated region
    $region18: #{tpu_custom_call.1} parent=1 // pred_check
      _
    $region19: #{tpu_custom_call.1} parent=1 // pred_check_branch
      %42 = sbr.rel (0) target = $region21
    $region20: #{tpu_custom_call.1} parent=1 // pred_region
      %43 = dma.done [#allocation5], 1024
    $region21: #{tpu_custom_call.1} parent=1 // pred_fallthru
      _
    // Predicated region
    $region22: #{tpu_custom_call.1} parent=1 // pred_check
      _
    $region23: #{tpu_custom_call.1} parent=1 // pred_check_branch
      %45 = sbr.rel (0) target = $region25
    $region24: #{tpu_custom_call.1} parent=1 // pred_region
      %46 = dma.done [#allocation8], 1024
    $region25: #{tpu_custom_call.1} parent=1 // pred_fallthru
      _
    %p48 = scmp.eq.s32.totalorder 0, 0
    // Predicated region
    $region26: #{tpu_custom_call.1} parent=1 // pred_check
      %p49 = pneg %p48
    $region27: #{tpu_custom_call.1} parent=1 // pred_check_branch
      %51 = sbr.rel (%p49) target = $region29
    $region28: #{tpu_custom_call.1} parent=1 // pred_region
      %52 = vst [vmem:[#allocation2] sm:$0xff] 0.0
      %53 = vst [vmem:[#allocation2 + $0x8] sm:$0xff] 0.0
      %54 = vst [vmem:[#allocation2 + $0x10] sm:$0xff] 0.0
      %55 = vst [vmem:[#allocation2 + $0x18] sm:$0xff] 0.0
      %56 = vst [vmem:[#allocation2 + $0x20] sm:$0xff] 0.0
      %57 = vst [vmem:[#allocation2 + $0x28] sm:$0xff] 0.0
      %58 = vst [vmem:[#allocation2 + $0x30] sm:$0xff] 0.0
      %59 = vst [vmem:[#allocation2 + $0x38] sm:$0xff] 0.0
      %60 = vst [vmem:[#allocation2 + $0x40] sm:$0xff] 0.0
      %61 = vst [vmem:[#allocation2 + $0x48] sm:$0xff] 0.0
      %62 = vst [vmem:[#allocation2 + $0x50] sm:$0xff] 0.0
      %63 = vst [vmem:[#allocation2 + $0x58] sm:$0xff] 0.0
      %64 = vst [vmem:[#allocation2 + $0x60] sm:$0xff] 0.0
      %65 = vst [vmem:[#allocation2 + $0x68] sm:$0xff] 0.0
      %66 = vst [vmem:[#allocation2 + $0x70] sm:$0xff] 0.0
      %67 = vst [vmem:[#allocation2 + $0x78] sm:$0xff] 0.0
    $region29: #{tpu_custom_call.1} parent=1 // pred_fallthru
      _
    %v68 = vld [vmem:[#allocation4] sm:$0xf]
    %v69 = vld [vmem:[#allocation4 + $0x4] sm:$0xf]
    %v70 = vld [vmem:[#allocation4 + $0x8] sm:$0xf]
    %v71 = vld [vmem:[#allocation4 + $0xc] sm:$0xf]
    %v72 = vld [vmem:[#allocation4 + $0x10] sm:$0xf]
    %v73 = vld [vmem:[#allocation4 + $0x14] sm:$0xf]
    %v74 = vld [vmem:[#allocation4 + $0x18] sm:$0xf]
    %v75 = vld [vmem:[#allocation4 + $0x1c] sm:$0xf]
    %v76 = vld [vmem:[#allocation4 + $0x20] sm:$0xf]
    %v77 = vld [vmem:[#allocation4 + $0x24] sm:$0xf]
    %v78 = vld [vmem:[#allocation4 + $0x28] sm:$0xf]
    %v79 = vld [vmem:[#allocation4 + $0x2c] sm:$0xf]
    %v80 = vld [vmem:[#allocation4 + $0x30] sm:$0xf]
    %v81 = vld [vmem:[#allocation4 + $0x34] sm:$0xf]
    %v82 = vld [vmem:[#allocation4 + $0x38] sm:$0xf]
    %v83 = vld [vmem:[#allocation4 + $0x3c] sm:$0xf]
    %v84 = vld [vmem:[#allocation7] sm:$0xf]
    %v85 = vld [vmem:[#allocation7 + $0x4] sm:$0xf]
    %v86 = vld [vmem:[#allocation7 + $0x8] sm:$0xf]
    %v87 = vld [vmem:[#allocation7 + $0xc] sm:$0xf]
    %v88 = vld [vmem:[#allocation7 + $0x10] sm:$0xf]
    %v89 = vld [vmem:[#allocation7 + $0x14] sm:$0xf]
    %v90 = vld [vmem:[#allocation7 + $0x18] sm:$0xf]
    %v91 = vld [vmem:[#allocation7 + $0x1c] sm:$0xf]
    %v92 = vld [vmem:[#allocation7 + $0x20] sm:$0xf]
    %v93 = vld [vmem:[#allocation7 + $0x24] sm:$0xf]
    %v94 = vld [vmem:[#allocation7 + $0x28] sm:$0xf]
    %v95 = vld [vmem:[#allocation7 + $0x2c] sm:$0xf]
    %v96 = vld [vmem:[#allocation7 + $0x30] sm:$0xf]
    %v97 = vld [vmem:[#allocation7 + $0x34] sm:$0xf]
    %v98 = vld [vmem:[#allocation7 + $0x38] sm:$0xf]
    %v99 = vld [vmem:[#allocation7 + $0x3c] sm:$0xf]
    %v100 = vld [vmem:[%s2] sm:$0x1]
    %v102 = vlaneseq
    %v103 = vshrl.u32 %v102, 7
    %v104 = vsub.s32 0, %v103
    %v105 = vrot.slane %v100, %v104
    %v123 = vunpack.c.l.b16 %v68
    %v124 = vunpack.c.l.b16 %v69
    %v125 = vunpack.c.l.b16 %v70
    %v126 = vunpack.c.l.b16 %v71
    %v127 = vunpack.c.l.b16 %v72
    %v128 = vunpack.c.l.b16 %v73
    %v129 = vunpack.c.l.b16 %v74
    %v130 = vunpack.c.l.b16 %v75
    %v131 = vunpack.c.l.b16 %v76
    %v132 = vunpack.c.l.b16 %v77
    %v133 = vunpack.c.l.b16 %v78
    %v134 = vunpack.c.l.b16 %v79
    %v135 = vunpack.c.l.b16 %v80
    %v136 = vunpack.c.l.b16 %v81
    %v137 = vunpack.c.l.b16 %v82
    %v138 = vunpack.c.l.b16 %v83
    %v139 = vpack.c.b16 %v124, %v123
    %v140 = vpack.c.b16 %v126, %v125
    %v141 = vpack.c.b16 %v128, %v127
    %v142 = vpack.c.b16 %v130, %v129
    %v143 = vpack.c.b16 %v132, %v131
    %v144 = vpack.c.b16 %v134, %v133
    %v145 = vpack.c.b16 %v136, %v135
    %v146 = vpack.c.b16 %v138, %v137
    %v171 = vunpack.c.l.b16 %v84
    %v172 = vunpack.c.l.b16 %v85
    %v173 = vunpack.c.l.b16 %v86
    %v174 = vunpack.c.l.b16 %v87
    %v175 = vunpack.c.l.b16 %v88
    %v176 = vunpack.c.l.b16 %v89
    %v177 = vunpack.c.l.b16 %v90
    %v178 = vunpack.c.l.b16 %v91
    %v179 = vunpack.c.l.b16 %v92
    %v180 = vunpack.c.l.b16 %v93
    %v181 = vunpack.c.l.b16 %v94
    %v182 = vunpack.c.l.b16 %v95
    %v183 = vunpack.c.l.b16 %v96
    %v184 = vunpack.c.l.b16 %v97
    %v185 = vunpack.c.l.b16 %v98
    %v186 = vunpack.c.l.b16 %v99
    %v187 = vpack.c.b16 %v172, %v171
    %v188 = vpack.c.b16 %v174, %v173
    %v189 = vpack.c.b16 %v176, %v175
    %v190 = vpack.c.b16 %v178, %v177
    %v191 = vpack.c.b16 %v180, %v179
    %v192 = vpack.c.b16 %v182, %v181
    %v193 = vpack.c.b16 %v184, %v183
    %v194 = vpack.c.b16 %v186, %v185
    %203 = vmatprep.subr.bf16.mxu0 0
    %204 = vmatpush1.bf16.msra.mxu0 %v187
    %205 = vmatprep.subr.bf16.mxu0 0
    %206 = vmatpush1.bf16.msra.mxu0 %v188
    %207 = vmatprep.subr.bf16.mxu0 0
    %208 = vmatpush1.bf16.msra.mxu0 %v189
    %209 = vmatprep.subr.bf16.mxu0 0
    %210 = vmatpush1.bf16.msra.mxu0 %v190
    %211 = vmatprep.subr.bf16.mxu0 0
    %212 = vmatpush1.bf16.msra.mxu0 %v191
    %213 = vmatprep.subr.bf16.mxu0 0
    %214 = vmatpush1.bf16.msra.mxu0 %v192
    %215 = vmatprep.subr.bf16.mxu0 0
    %216 = vmatpush1.bf16.msra.mxu0 %v193
    %217 = vmatprep.subr.bf16.mxu0 0
    %218 = vmatpush1.bf16.msra.mxu0 %v194
    %219 = vmatprep.subr.bf16.mxu0 0
    %220 = vmatpush1.bf16.msra.mxu0 0
    %221 = vmatprep.subr.bf16.mxu0 0
    %222 = vmatpush1.bf16.msra.mxu0 0
    %223 = vmatprep.subr.bf16.mxu0 0
    %224 = vmatpush1.bf16.msra.mxu0 0
    %225 = vmatprep.subr.bf16.mxu0 0
    %226 = vmatpush1.bf16.msra.mxu0 0
    %227 = vmatprep.subr.bf16.mxu0 0
    %228 = vmatpush1.bf16.msra.mxu0 0
    %229 = vmatprep.subr.bf16.mxu0 0
    %230 = vmatpush1.bf16.msra.mxu0 0
    %231 = vmatprep.subr.bf16.mxu0 0
    %232 = vmatpush1.bf16.msra.mxu0 0
    %233 = vmatprep.subr.bf16.mxu0 0
    %234 = vmatpush1.bf16.msra.mxu0 0
    %235 = vmatprep.mubr.bf16.mxu0 0
    %236 = vmatmul.mubr.bf16.gmra.mrb[0].mxu0 %v139
    %v237 = vpop.f32.mrb[0].mxu0
    %v238 = vadd.f32 %v105, %v237
    %v239 = vpop.f32.mrb[0].mxu0
    %v240 = vpop.f32.mrb[0].mxu0
    %v241 = vadd.f32 %v105, %v240
    %v242 = vpop.f32.mrb[0].mxu0
    %243 = vmatprep.mubr.bf16.mxu0 0
    %244 = vmatmul.mubr.bf16.gmra.mrb[0].mxu0 %v140
    %v245 = vpop.f32.mrb[0].mxu0
    %v246 = vadd.f32 %v105, %v245
    %v247 = vpop.f32.mrb[0].mxu0
    %v248 = vpop.f32.mrb[0].mxu0
    %v249 = vadd.f32 %v105, %v248
    %v250 = vpop.f32.mrb[0].mxu0
    %251 = vmatprep.mubr.bf16.mxu0 0
    %252 = vmatmul.mubr.bf16.gmra.mrb[0].mxu0 %v141
    %v253 = vpop.f32.mrb[0].mxu0
    %v254 = vadd.f32 %v105, %v253
    %v255 = vpop.f32.mrb[0].mxu0
    %v256 = vpop.f32.mrb[0].mxu0
    %v257 = vadd.f32 %v105, %v256
    %v258 = vpop.f32.mrb[0].mxu0
    %259 = vmatprep.mubr.bf16.mxu0 0
    %260 = vmatmul.mubr.bf16.gmra.mrb[0].mxu0 %v142
    %v261 = vpop.f32.mrb[0].mxu0
    %v262 = vadd.f32 %v105, %v261
    %v263 = vpop.f32.mrb[0].mxu0
    %v264 = vpop.f32.mrb[0].mxu0
    %v265 = vadd.f32 %v105, %v264
    %v266 = vpop.f32.mrb[0].mxu0
    %267 = vmatprep.mubr.bf16.mxu0 0
    %268 = vmatmul.mubr.bf16.gmra.mrb[0].mxu0 %v143
    %v269 = vpop.f32.mrb[0].mxu0
    %v270 = vadd.f32 %v105, %v269
    %v271 = vpop.f32.mrb[0].mxu0
    %v272 = vpop.f32.mrb[0].mxu0
    %v273 = vadd.f32 %v105, %v272
    %v274 = vpop.f32.mrb[0].mxu0
    %275 = vmatprep.mubr.bf16.mxu0 0
    %276 = vmatmul.mubr.bf16.gmra.mrb[0].mxu0 %v144
    %v277 = vpop.f32.mrb[0].mxu0
    %v278 = vadd.f32 %v105, %v277
    %v279 = vpop.f32.mrb[0].mxu0
    %v280 = vpop.f32.mrb[0].mxu0
    %v281 = vadd.f32 %v105, %v280
    %v282 = vpop.f32.mrb[0].mxu0
    %283 = vmatprep.mubr.bf16.mxu0 0
    %284 = vmatmul.mubr.bf16.gmra.mrb[0].mxu0 %v145
    %v285 = vpop.f32.mrb[0].mxu0
    %v286 = vadd.f32 %v105, %v285
    %v287 = vpop.f32.mrb[0].mxu0
    %v288 = vpop.f32.mrb[0].mxu0
    %v289 = vadd.f32 %v105, %v288
    %v290 = vpop.f32.mrb[0].mxu0
    %291 = vmatprep.mubr.bf16.mxu0 0
    %292 = vmatmul.mubr.bf16.gmra.mrb[0].mxu0 %v146
    %v293 = vpop.f32.mrb[0].mxu0
    %v294 = vadd.f32 %v105, %v293
    %v295 = vpop.f32.mrb[0].mxu0
    %v296 = vpop.f32.mrb[0].mxu0
    %v297 = vadd.f32 %v105, %v296
    %v298 = vpop.f32.mrb[0].mxu0
    %299 = vdwg.mxu0
    %v300 = vmul.f32 %v238, %v238
    %v301 = vmul.f32 %v241, %v241
    %v302 = vmul.f32 %v246, %v246
    %v303 = vmul.f32 %v249, %v249
    %v304 = vmul.f32 %v254, %v254
    %v305 = vmul.f32 %v257, %v257
    %v306 = vmul.f32 %v262, %v262
    %v307 = vmul.f32 %v265, %v265
    %v308 = vmul.f32 %v270, %v270
    %v309 = vmul.f32 %v273, %v273
    %v310 = vmul.f32 %v278, %v278
    %v311 = vmul.f32 %v281, %v281
    %v312 = vmul.f32 %v286, %v286
    %v313 = vmul.f32 %v289, %v289
    %v314 = vmul.f32 %v294, %v294
    %v315 = vmul.f32 %v297, %v297
    %v316 = vld [vmem:[#allocation2] sm:$0xff]
    %v317 = vld [vmem:[#allocation2 + $0x8] sm:$0xff]
    %v318 = vld [vmem:[#allocation2 + $0x10] sm:$0xff]
    %v319 = vld [vmem:[#allocation2 + $0x18] sm:$0xff]
    %v320 = vld [vmem:[#allocation2 + $0x20] sm:$0xff]
    %v321 = vld [vmem:[#allocation2 + $0x28] sm:$0xff]
    %v322 = vld [vmem:[#allocation2 + $0x30] sm:$0xff]
    %v323 = vld [vmem:[#allocation2 + $0x38] sm:$0xff]
    %v324 = vld [vmem:[#allocation2 + $0x40] sm:$0xff]
    %v325 = vld [vmem:[#allocation2 + $0x48] sm:$0xff]
    %v326 = vld [vmem:[#allocation2 + $0x50] sm:$0xff]
    %v327 = vld [vmem:[#allocation2 + $0x58] sm:$0xff]
    %v328 = vld [vmem:[#allocation2 + $0x60] sm:$0xff]
    %v329 = vld [vmem:[#allocation2 + $0x68] sm:$0xff]
    %v330 = vld [vmem:[#allocation2 + $0x70] sm:$0xff]
    %v331 = vld [vmem:[#allocation2 + $0x78] sm:$0xff]
    %v332 = vadd.f32 %v316, %v300
    %v333 = vadd.f32 %v317, %v301
    %v334 = vadd.f32 %v318, %v302
    %v335 = vadd.f32 %v319, %v303
    %v336 = vadd.f32 %v320, %v304
    %v337 = vadd.f32 %v321, %v305
    %v338 = vadd.f32 %v322, %v306
    %v339 = vadd.f32 %v323, %v307
    %v340 = vadd.f32 %v324, %v308
    %v341 = vadd.f32 %v325, %v309
    %v342 = vadd.f32 %v326, %v310
    %v343 = vadd.f32 %v327, %v311
    %v344 = vadd.f32 %v328, %v312
    %v345 = vadd.f32 %v329, %v313
    %v346 = vadd.f32 %v330, %v314
    %v347 = vadd.f32 %v331, %v315
    %348 = vst [vmem:[#allocation2] sm:$0xff] %v332
    %349 = vst [vmem:[#allocation2 + $0x8] sm:$0xff] %v333
    %350 = vst [vmem:[#allocation2 + $0x10] sm:$0xff] %v334
    %351 = vst [vmem:[#allocation2 + $0x18] sm:$0xff] %v335
    %352 = vst [vmem:[#allocation2 + $0x20] sm:$0xff] %v336
    %353 = vst [vmem:[#allocation2 + $0x28] sm:$0xff] %v337
    %354 = vst [vmem:[#allocation2 + $0x30] sm:$0xff] %v338
    %355 = vst [vmem:[#allocation2 + $0x38] sm:$0xff] %v339
    %356 = vst [vmem:[#allocation2 + $0x40] sm:$0xff] %v340
    %357 = vst [vmem:[#allocation2 + $0x48] sm:$0xff] %v341
    %358 = vst [vmem:[#allocation2 + $0x50] sm:$0xff] %v342
    %359 = vst [vmem:[#allocation2 + $0x58] sm:$0xff] %v343
    %360 = vst [vmem:[#allocation2 + $0x60] sm:$0xff] %v344
    %361 = vst [vmem:[#allocation2 + $0x68] sm:$0xff] %v345
    %362 = vst [vmem:[#allocation2 + $0x70] sm:$0xff] %v346
    %363 = vst [vmem:[#allocation2 + $0x78] sm:$0xff] %v347
    // Predicated region
    $region30: #{tpu_custom_call.1} parent=1 // pred_check
      %p364 = pneg %p48
    $region31: #{tpu_custom_call.1} parent=1 // pred_check_branch
      %366 = sbr.rel (%p364) target = $region33
    $region32: #{tpu_custom_call.1} parent=1 // pred_region
      %v367 = vld [vmem:[#allocation2] sm:$0xff]
      %v368 = vld [vmem:[#allocation2 + $0x8] sm:$0xff]
      %v369 = vld [vmem:[#allocation2 + $0x10] sm:$0xff]
      %v370 = vld [vmem:[#allocation2 + $0x18] sm:$0xff]
      %v371 = vld [vmem:[#allocation2 + $0x20] sm:$0xff]
      %v372 = vld [vmem:[#allocation2 + $0x28] sm:$0xff]
      %v373 = vld [vmem:[#allocation2 + $0x30] sm:$0xff]
      %v374 = vld [vmem:[#allocation2 + $0x38] sm:$0xff]
      %v375 = vld [vmem:[#allocation2 + $0x40] sm:$0xff]
      %v376 = vld [vmem:[#allocation2 + $0x48] sm:$0xff]
      %v377 = vld [vmem:[#allocation2 + $0x50] sm:$0xff]
      %v378 = vld [vmem:[#allocation2 + $0x58] sm:$0xff]
      %v379 = vld [vmem:[#allocation2 + $0x60] sm:$0xff]
      %v380 = vld [vmem:[#allocation2 + $0x68] sm:$0xff]
      %v381 = vld [vmem:[#allocation2 + $0x70] sm:$0xff]
      %v382 = vld [vmem:[#allocation2 + $0x78] sm:$0xff]
      %383 = vxpose.xlu0.b32.start [1/16] %v367, 128
      %384 = vxpose.xlu0.b32.cont [2/16] %v368, 128
      %385 = vxpose.xlu0.b32.cont [3/16] %v369, 128
      %386 = vxpose.xlu0.b32.cont [4/16] %v370, 128
      %387 = vxpose.xlu0.b32.cont [5/16] %v371, 128
      %388 = vxpose.xlu0.b32.cont [6/16] %v372, 128
      %389 = vxpose.xlu0.b32.cont [7/16] %v373, 128
      %390 = vxpose.xlu0.b32.cont [8/16] %v374, 128
      %391 = vxpose.xlu0.b32.cont [9/16] %v375, 128
      %392 = vxpose.xlu0.b32.cont [10/16] %v376, 128
      %393 = vxpose.xlu0.b32.cont [11/16] %v377, 128
      %394 = vxpose.xlu0.b32.cont [12/16] %v378, 128
      %395 = vxpose.xlu0.b32.cont [13/16] %v379, 128
      %396 = vxpose.xlu0.b32.cont [14/16] %v380, 128
      %397 = vxpose.xlu0.b32.cont [15/16] %v381, 128
      %398 = vxpose.xlu0.b32.end [16/16] %v382, 128
      %v399 = vpop.trf.xlu0
      %v400 = vpop.trf.xlu0
      %v401 = vpop.trf.xlu0
      %v402 = vpop.trf.xlu0
      %v403 = vpop.trf.xlu0
      %v404 = vpop.trf.xlu0
      %v405 = vpop.trf.xlu0
      %v406 = vpop.trf.xlu0
      %v407 = vpop.trf.xlu0
      %v408 = vpop.trf.xlu0
      %v409 = vpop.trf.xlu0
      %v410 = vpop.trf.xlu0
      %v411 = vpop.trf.xlu0
      %v412 = vpop.trf.xlu0
      %v413 = vpop.trf.xlu0
      %v414 = vpop.trf.xlu0
      %v415 = vadd.f32 %v399, %v400
      %v416 = vadd.f32 %v415, %v401
      %v417 = vadd.f32 %v416, %v402
      %v418 = vadd.f32 %v417, %v403
      %v419 = vadd.f32 %v418, %v404
      %v420 = vadd.f32 %v419, %v405
      %v421 = vadd.f32 %v420, %v406
      %v422 = vadd.f32 %v421, %v407
      %v423 = vadd.f32 %v422, %v408
      %v424 = vadd.f32 %v423, %v409
      %v425 = vadd.f32 %v424, %v410
      %v426 = vadd.f32 %v425, %v411
      %v427 = vadd.f32 %v426, %v412
      %v428 = vadd.f32 %v427, %v413
      %v429 = vadd.f32 %v428, %v414
      %v430 = vrot.slane %v429, 4
      %v431 = vadd.f32 %v429, %v430
      %v432 = vrot.slane %v431, 2
      %v433 = vadd.f32 %v431, %v432
      %v434 = vrot.slane %v433, 1
      %v435 = vadd.f32 %v433, %v434
      %s436 = sld [smem:[#allocation3]]
      %v437 = vmul.f32 %v435, 0.5
      %v438 = vstv %s436
      %v439 = vsub.f32 %v438, %v437
      %440 = vst [vmem:[#allocation9] sm:$0x1] %v439
    $region33: #{tpu_custom_call.1} parent=1 // pred_fallthru
      _
    // Predicated region
    $region34: #{tpu_custom_call.1} parent=1 // pred_check
      _
    $region35: #{tpu_custom_call.1} parent=1 // pred_check_branch
      %442 = sbr.rel (0) target = $region37
    $region36: #{tpu_custom_call.1} parent=1 // pred_region
      %s444 = ssub.s32 16, 16
      %445 = vsyncadd [#allocation6], %s444
      %s447 = sshll.u32 [#allocation9], 4
      %s448 = int_to_ptr.vmem [resolvable:$true] %s447
      %450 = dma.vmem_to_hbm [thread:$0]  %s448, 16, %s4, [#allocation6]
    $region37: #{tpu_custom_call.1} parent=1 // pred_fallthru
      _
    // Predicated region
    $region38: #{tpu_custom_call.1} parent=1 // pred_check
      _
    $region39: #{tpu_custom_call.1} parent=1 // pred_check_branch
      %452 = sbr.rel (0) target = $region41
    $region40: #{tpu_custom_call.1} parent=1 // pred_region
      %453 = dma.done [#allocation6], 16
    $region41: #{tpu_custom_call.1} parent=1 // pred_fallthru
      _
    %454 = vsyncpa [#allocation5], 1
    %455 = vsyncpa [#allocation8], 1
    %456 = vsyncpa [#allocation6], 1

</llo_original>
